<compile_context>
chip_gen: v6e
topology: v6e:2x2x1
jax: 0.10.0
libtpu: 0.0.40
codegen_flags: <defaults>
</compile_context>

<pallas_src>
import functools
import math

import jax
import jax.numpy as jnp
from jax.experimental import pallas as pl
from jax.experimental.pallas import tpu as pltpu


_C_TARGET = 512                          # preferred lane width (mult. of 128)
_TARGET_BLOCK_BYTES = 2 * 1024 * 1024    # ~2 MiB of d1 per grid step


def _cdiv(a, b):
    return -(-a // b)


def _round_up(x, m):
    return ((x + m - 1) // m) * m


def _sublane_multiple(dtype):
    # (8,128) tiling for 4-byte dtypes, (16,128) for 2-byte, (32,128) for 1-byte.
    return max(8, 32 // jnp.dtype(dtype).itemsize)


def _robust_loss_kernel(*refs, d_dim, epsilon, inv_norm_sq, has_mask):
    """Per-block column partial sums over the interleaved (R_TILE, C) layout.

    refs: d1_ref, d2_ref, [mask_ref,] out_ref
      d1/d2/mask blocks: (R_TILE, C) — lane k of row r holds element
      (node, dim) = divmod(r*C + k, d_dim) of the flattened input.
      out block: (1, 1, C) column sums of phi; only lanes with lane % d_dim == 0
      hold valid node sums (the wrapper discards the rest).
    """
    if has_mask:
        d1_ref, d2_ref, m_ref, out_ref = refs
    else:
        d1_ref, d2_ref, out_ref = refs
        m_ref = None

    x = d1_ref[...].astype(jnp.float32) - d2_ref[...].astype(jnp.float32)
    y = x * x
    if has_mask:
        y = y * m_ref[...].astype(jnp.float32)

    c = y.shape[-1]
    # D-reduction via lane rotation (XLU slot, free under the HBM bound).
    # pltpu.roll matches jnp.roll; shift = c - s (== -s) brings y[:, k+s] to
    # lane k, so lane n*d_dim accumulates the node's full sum_d y. Other lanes
    # hold harmless garbage the wrapper never reads.
    xtx = y
    for s in range(1, d_dim):
        xtx = xtx + pltpu.roll(y, shift=c - s, axis=1)

    if inv_norm_sq != 1.0:               # folded 1/norm^2
        t = xtx * jnp.float32(inv_norm_sq) + jnp.float32(epsilon)
    else:
        t = xtx + jnp.float32(epsilon)
    phi = jnp.sqrt(t)                    # single EUP sqrt

    col = jnp.sum(phi, axis=0, keepdims=True)   # sublane reduce only -> (1, C)
    out_ref[...] = col.reshape(1, 1, c)


def robust_loss(d1, d2, mask=None, *, epsilon=1e-5, norm=None):
    """Pallas implementation of RobustLoss.forward.

    d1, d2: [B, N, D] (f32 or bf16). mask: None, [B, N], [B, N, 1] (per-node)
    or [B, N, D] (elementwise). Returns a scalar float32 loss.
    """
    assert d1.shape == d2.shape and d1.ndim == 3
    B, N, D = d1.shape
    M = B * N
    E = M * D

    # --- mask preprocessing: narrow-dtype streaming, no transposes ----------
    mask_flat = None
    if mask is not None:
        if mask.shape == (B, N) or mask.shape == (B, N, 1):
            # Per-node mask: expand across D in bf16 so it shares the data's
            # interleaved layout (0/1 masks are exact in bf16).
            m = mask.reshape(M, 1).astype(jnp.bfloat16)
            mask_flat = jnp.broadcast_to(m, (M, D)).reshape(E)
        elif mask.shape == (B, N, D):
            m = mask
            if not jnp.issubdtype(m.dtype, jnp.floating):
                m = m.astype(jnp.bfloat16)
            mask_flat = m.reshape(E)
        else:
            raise ValueError(f"unsupported mask shape {mask.shape}")

    # --- tiling: natural interleaved layout, lane-dense (R_TOTAL, C) --------
    # C must be a multiple of 128 (lanes) and of D (no node straddles a row).
    c_base = (128 * D) // math.gcd(128, D)
    max_scale = max(1, _C_TARGET // c_base)
    want_scale = max(1, _cdiv(E, c_base * 8))       # keep padding small if tiny
    C = c_base * min(max_scale, want_scale)

    row_mult = max(_sublane_multiple(d1.dtype), _sublane_multiple(d2.dtype))
    if mask_flat is not None:
        row_mult = max(row_mult, _sublane_multiple(mask_flat.dtype))

    rows_needed = max(1, _cdiv(E, C))
    itemsize = jnp.dtype(d1.dtype).itemsize
    r_cap = max(row_mult,
                (_TARGET_BLOCK_BYTES // (C * itemsize)) // row_mult * row_mult)
    nb = max(1, _cdiv(rows_needed, r_cap))
    # v7x megacore: shard the parallel axis across both TensorCores (even nb>=2)
    # whenever there are at least two sublane tiles of real rows. On v5e/v6e
    # this just becomes a 2-step loop (no cost).
    if rows_needed >= 2 * row_mult:
        nb = max(nb, 2)
        if nb % 2:
            nb += 1
    R_TILE = _round_up(_cdiv(rows_needed, nb), row_mult)
    R_TOTAL = R_TILE * nb
    E_pad = R_TOTAL * C
    n_pad_nodes = E_pad // D - M                    # zero-padded node slots

    def to_tiles(a):
        flat = a.reshape(E)
        if E_pad != E:                              # single pad materialization
            flat = jnp.pad(flat, (0, E_pad - E))
        return flat.reshape(R_TOTAL, C)

    inputs = [to_tiles(d1), to_tiles(d2)]
    spec = pl.BlockSpec((R_TILE, C), lambda i: (i, 0))
    in_specs = [spec, spec]
    if mask_flat is not None:
        inputs.append(to_tiles(mask_flat))
        in_specs.append(spec)

    inv_norm_sq = 1.0 if norm is None else 1.0 / (float(norm) ** 2)

    kernel = functools.partial(
        _robust_loss_kernel,
        d_dim=D,
        epsilon=float(epsilon),
        inv_norm_sq=inv_norm_sq,
        has_mask=mask_flat is not None,
    )

    partials = pl.pallas_call(
        kernel,
        out_shape=jax.ShapeDtypeStruct((nb, 1, C), jnp.float32),
        grid_spec=pltpu.PrefetchScalarGridSpec(
            num_scalar_prefetch=0,
            grid=(nb,),
            in_specs=in_specs,
            out_specs=pl.BlockSpec((1, 1, C), lambda i: (i, 0, 0)),
        ),
        compiler_params=pltpu.CompilerParams(
            dimension_semantics=("parallel",),
            vmem_limit_bytes=32 * 1024 * 1024,
        ),
    )(*inputs)

    # Valid node sums live at lanes where lane % D == 0. Every zero-padded node
    # slot contributes exactly sqrt(epsilon); remove it as a constant instead
    # of masking in-kernel. Single cross-lane reduce + /B happen here.
    total = jnp.sum(partials[:, 0, ::D])
    pad_correction = jnp.float32(n_pad_nodes) * jnp.sqrt(jnp.float32(epsilon))
    return (total - pad_correction) / jnp.float32(B)


def robust_loss_ref(d1, d2, mask=None, *, epsilon=1e-5, norm=None):
    """Plain-JAX reference mirroring the PyTorch forward (intended semantics)."""
    if mask is None:
        mask = jnp.ones_like(d1)
    elif mask.ndim == 2:
        mask = mask[..., None]
    x = d1 - d2
    if norm is not None:
        x = x / norm
    xtx = jnp.sum(x * x * mask, axis=-1)
    phi = jnp.sqrt(xtx + epsilon)
    return jnp.sum(phi) / d1.shape[0]


if __name__ == "__main__":
    key = jax.random.PRNGKey(0)
    k1, k2, k3, k4, k5 = jax.random.split(key, 5)

    # Small shapes consistent with the module: batch=2, nodes=8, disp dim=2.
    B, N, D = 2, 8, 2
    d1 = jax.random.normal(k1, (B, N, D), dtype=jnp.float32)
    d2 = jax.random.normal(k2, (B, N, D), dtype=jnp.float32)
    node_mask = (jax.random.uniform(k3, (B, N)) > 0.25).astype(jnp.float32)
    elem_mask = jnp.broadcast_to(node_mask[..., None], (B, N, D))

    # (a) full elementwise mask + norm.
    ref = robust_loss_ref(d1, d2, elem_mask, epsilon=1e-5, norm=2.0)
    out = jax.block_until_ready(robust_loss(d1, d2, elem_mask, epsilon=1e-5, norm=2.0))
    assert jnp.allclose(out, ref, rtol=1e-4, atol=1e-4), (out, ref)

    # (b) per-node (B, N) mask — low-traffic bf16 mask path, same math as (a).
    out = jax.block_until_ready(robust_loss(d1, d2, node_mask, epsilon=1e-5, norm=2.0))
    assert jnp.allclose(out, ref, rtol=1e-4, atol=1e-4), (out, ref)

    # (b') per-node (B, N, 1) mask.
    out = jax.block_until_ready(
        robust_loss(d1, d2, node_mask[..., None], epsilon=1e-5, norm=2.0))
    assert jnp.allclose(out, ref, rtol=1e-4, atol=1e-4), (out, ref)

    # (c) no mask / no norm (specialized 2-input kernel).
    ref = robust_loss_ref(d1, d2)
    out = jax.block_until_ready(robust_loss(d1, d2))
    assert jnp.allclose(out, ref, rtol=1e-4, atol=1e-4), (out, ref)

    # (d) multi-block f32 case: nb >= 2 (both v7x TCs), padding correction path.
    B2, N2 = 2, 3000
    d1b = jax.random.normal(k4, (B2, N2, D), dtype=jnp.float32)
    d2b = jax.random.normal(k5, (B2, N2, D), dtype=jnp.float32)
    ref = robust_loss_ref(d1b, d2b, epsilon=1e-5, norm=3.0)
    out = jax.block_until_ready(robust_loss(d1b, d2b, epsilon=1e-5, norm=3.0))
    assert jnp.allclose(out, ref, rtol=2e-4, atol=1e-2), (out, ref)

    # (e) bf16 inputs (half the HBM traffic); compare against f32 math on the
    # same bf16-rounded values.
    d1h, d2h = d1b.astype(jnp.bfloat16), d2b.astype(jnp.bfloat16)
    ref = robust_loss_ref(d1h.astype(jnp.float32), d2h.astype(jnp.float32),
                          epsilon=1e-5, norm=3.0)
    out = jax.block_until_ready(robust_loss(d1h, d2h, epsilon=1e-5, norm=3.0))
    assert jnp.allclose(out, ref, rtol=2e-4, atol=1e-2), (out, ref)

    print("KERNEL_OK")
</pallas_src>

<mosaic_0001>
module attributes {stable_mosaic.version = 11 : i64} {
  func.func @_robust_loss_kernel(%arg0: i32, %arg1: memref<8x128xf32, #tpu.memory_space<vmem>>, %arg2: memref<8x128xf32, #tpu.memory_space<vmem>>, %arg3: memref<8x128xf32, #tpu.memory_space<vmem>>, %arg4: memref<1x1x128xf32, #tpu.memory_space<vmem>>) attributes {dimension_semantics = [#tpu.dimension_semantics<parallel>], iteration_bounds = array<i64: 1>, scalar_prefetch = 0 : i64, scratch_operands = 0 : i64, tpu.core_type = #tpu.core_type<tc>, window_params = [{transform_indices = @transform_0, window_bounds = array<i64: 8, 128>}, {transform_indices = @transform_1, window_bounds = array<i64: 8, 128>}, {transform_indices = @transform_2, window_bounds = array<i64: 8, 128>}, {transform_indices = @transform_3, window_bounds = array<i64: 1, 1, 128>}]} {
    %c0 = arith.constant 0 : index
    %c0_0 = arith.constant 0 : index
    %0 = vector.load %arg1[%c0, %c0_0] : memref<8x128xf32, #tpu.memory_space<vmem>>, vector<8x128xf32>
    %c0_1 = arith.constant 0 : index
    %c0_2 = arith.constant 0 : index
    %1 = vector.load %arg2[%c0_1, %c0_2] : memref<8x128xf32, #tpu.memory_space<vmem>>, vector<8x128xf32>
    %2 = arith.subf %0, %1 : vector<8x128xf32>
    %3 = arith.mulf %2, %2 : vector<8x128xf32>
    %c0_3 = arith.constant 0 : index
    %c0_4 = arith.constant 0 : index
    %4 = vector.load %arg3[%c0_3, %c0_4] : memref<8x128xf32, #tpu.memory_space<vmem>>, vector<8x128xf32>
    %5 = arith.mulf %3, %4 : vector<8x128xf32>
    %c127_i32 = arith.constant 127 : i32
    %6 = tpu.dynamic_rotate %5 by %c127_i32 dim 1 : vector<8x128xf32>, i32 -> vector<8x128xf32>
    %7 = arith.addf %5, %6 : vector<8x128xf32>
    %cst = arith.constant 2.500000e-01 : f32
    %8 = vector.broadcast %cst : f32 to vector<8x128xf32>
    %9 = arith.mulf %7, %8 : vector<8x128xf32>
    %cst_5 = arith.constant 9.99999974E-6 : f32
    %10 = vector.broadcast %cst_5 : f32 to vector<8x128xf32>
    %11 = arith.addf %9, %10 : vector<8x128xf32>
    %12 = math.sqrt %11 : vector<8x128xf32>
    %cst_6 = arith.constant dense<0.000000e+00> : vector<128xf32>
    %13 = vector.multi_reduction <add>, %12, %cst_6 [0] : vector<8x128xf32> to vector<128xf32>
    %14 = vector.shape_cast %13 : vector<128xf32> to vector<1x128xf32>
    %15 = vector.shape_cast %14 : vector<1x128xf32> to vector<1x1x128xf32>
    %c0_7 = arith.constant 0 : index
    %c0_8 = arith.constant 0 : index
    %c0_9 = arith.constant 0 : index
    %16 = vector.load %arg4[%c0_7, %c0_8, %c0_9] : memref<1x1x128xf32, #tpu.memory_space<vmem>>, vector<1x1x128xf32>
    tpu.vector_store %arg4[%c0_7, %c0_8, %c0_9], %15 {strides = array<i32>} : memref<1x1x128xf32, #tpu.memory_space<vmem>>, vector<1x1x128xf32>,
    return
  }
  func.func @transform_0(%arg0: i32) -> (i32, i32) {
    %c0_i32 = arith.constant 0 : i32
    %c0_i32_0 = arith.constant 0 : i32
    return %arg0, %c0_i32 : i32, i32
  }
  func.func @transform_1(%arg0: i32) -> (i32, i32) {
    %c0_i32 = arith.constant 0 : i32
    %c0_i32_0 = arith.constant 0 : i32
    return %arg0, %c0_i32 : i32, i32
  }
  func.func @transform_2(%arg0: i32) -> (i32, i32) {
    %c0_i32 = arith.constant 0 : i32
    %c0_i32_0 = arith.constant 0 : i32
    return %arg0, %c0_i32 : i32, i32
  }
  func.func @transform_3(%arg0: i32) -> (i32, i32, i32) {
    %c0_i32 = arith.constant 0 : i32
    %c0_i32_0 = arith.constant 0 : i32
    %c0_i32_1 = arith.constant 0 : i32
    return %arg0, %c0_i32, %c0_i32_0 : i32, i32, i32
  }
}

</mosaic_0001>

<llo_original>
// kernel: tpu_custom_call.1
$region0: #{tpu_custom_call.1}
  #allocation0 [shape = 'u32[]', space=smem, size = 0x4, offset = 0x4, fixed_abs, tag = 'smem constant byte address 0x4 - core index']
  #allocation1 [shape = 'u32[144,128]{1,0:T(1,128)}', space=vmem, size = 0x12000, scoped, tag = 'internal scratch']
  %s0 = inlined_call_operand.hbm [shape: f32[8,128], index: 0, kind: input, shape index: {}]
  %s1 = inlined_call_operand.hbm [shape: f32[8,128], index: 1, kind: input, shape index: {}]
  %s2 = inlined_call_operand.hbm [shape: f32[8,128], index: 2, kind: input, shape index: {}]
  %s3 = inlined_call_operand.hbm [shape: f32[1,1,128], index: 3, kind: output, shape index: {}]
  %s4 = sld [smem:[#allocation0]]
  $region34: #{tpu_custom_call.1} parent=0
    _
  %s6 = ssub.s32 1, %s4
  %s7 = scalar_select 0, %s6, %s4
  $region1: #{tpu_custom_call.1} parent=0
    #allocation2 [shape = 'u8[4096]{0}', space=vmem, size = 0x1000, scoped, tag = 'input window, operand 0, single buffered']
    #allocation3 [shape = 's32[1]{0}', space=sflag, size = 0x4, scoped, tag = 'scoped memory for tpu_custom_call.1']
    #allocation4 [shape = 's32[1]{0}', space=sflag, size = 0x4, scoped, tag = 'scoped memory for tpu_custom_call.1']
    #allocation5 [shape = 'u8[4096]{0}', space=vmem, size = 0x1000, scoped, tag = 'input window, operand 1, single buffered']
    #allocation6 [shape = 's32[1]{0}', space=sflag, size = 0x4, scoped, tag = 'scoped memory for tpu_custom_call.1']
    #allocation7 [shape = 'u8[4096]{0}', space=vmem, size = 0x1000, scoped, tag = 'input window, operand 2, single buffered']
    #allocation8 [shape = 'u8[512]{0}', space=vmem, size = 0x400, scoped, tag = 'output window, operand 0, single buffered']
    %8 = vsyncpa [#allocation3], 0
    %9 = vsyncpa [#allocation6], 0
    %10 = vsyncpa [#allocation4], 0
    // Predicated region
    $region2: #{tpu_custom_call.1} parent=1 // pred_check
      _
    $region3: #{tpu_custom_call.1} parent=1 // pred_check_branch
      %12 = sbr.rel (0) target = $region5
    $region4: #{tpu_custom_call.1} parent=1 // pred_region
      %s14 = ssub.s32 128, 128
      %15 = vsyncadd [#allocation3], %s14
      %s17 = sshll.u32 [#allocation2], 4
      %s18 = int_to_ptr.vmem [resolvable:$true] %s17
      %20 = dma.hbm_to_vmem [thread:$0]  %s0, 128, %s18, [#allocation3]
    $region5: #{tpu_custom_call.1} parent=1 // pred_fallthru
      _
    // Predicated region
    $region6: #{tpu_custom_call.1} parent=1 // pred_check
      _
    $region7: #{tpu_custom_call.1} parent=1 // pred_check_branch
      %22 = sbr.rel (0) target = $region9
    $region8: #{tpu_custom_call.1} parent=1 // pred_region
      %s24 = ssub.s32 128, 128
      %25 = vsyncadd [#allocation6], %s24
      %s27 = sshll.u32 [#allocation5], 4
      %s28 = int_to_ptr.vmem [resolvable:$true] %s27
      %30 = dma.hbm_to_vmem [thread:$0]  %s1, 128, %s28, [#allocation6]
    $region9: #{tpu_custom_call.1} parent=1 // pred_fallthru
      _
    // Predicated region
    $region10: #{tpu_custom_call.1} parent=1 // pred_check
      _
    $region11: #{tpu_custom_call.1} parent=1 // pred_check_branch
      %32 = sbr.rel (0) target = $region13
    $region12: #{tpu_custom_call.1} parent=1 // pred_region
      %s34 = ssub.s32 128, 128
      %35 = vsyncadd [#allocation6], %s34
      %s37 = sshll.u32 [#allocation7], 4
      %s38 = int_to_ptr.vmem [resolvable:$true] %s37
      %40 = dma.hbm_to_vmem [thread:$0]  %s2, 128, %s38, [#allocation6]
    $region13: #{tpu_custom_call.1} parent=1 // pred_fallthru
      _
    // Predicated region
    $region14: #{tpu_custom_call.1} parent=1 // pred_check
      _
    $region15: #{tpu_custom_call.1} parent=1 // pred_check_branch
      %42 = sbr.rel (0) target = $region17
    $region16: #{tpu_custom_call.1} parent=1 // pred_region
      %43 = dma.done [#allocation3], 128
    $region17: #{tpu_custom_call.1} parent=1 // pred_fallthru
      _
    // Predicated region
    $region18: #{tpu_custom_call.1} parent=1 // pred_check
      _
    $region19: #{tpu_custom_call.1} parent=1 // pred_check_branch
      %45 = sbr.rel (0) target = $region21
    $region20: #{tpu_custom_call.1} parent=1 // pred_region
      %46 = dma.done [#allocation6], 128
    $region21: #{tpu_custom_call.1} parent=1 // pred_fallthru
      _
    // Predicated region
    $region22: #{tpu_custom_call.1} parent=1 // pred_check
      _
    $region23: #{tpu_custom_call.1} parent=1 // pred_check_branch
      %48 = sbr.rel (0) target = $region25
    $region24: #{tpu_custom_call.1} parent=1 // pred_region
      %49 = dma.done [#allocation6], 128
    $region25: #{tpu_custom_call.1} parent=1 // pred_fallthru
      _
    %v50 = vld [vmem:[#allocation2] sm:$0xff]
    %v51 = vld [vmem:[#allocation5] sm:$0xff]
    %v52 = vsub.f32 %v50, %v51
    %v53 = vmul.f32 %v52, %v52
    %v54 = vld [vmem:[#allocation7] sm:$0xff]
    %v55 = vmul.f32 %v53, %v54
    %56 = vrot.lane.b32.xlu0 %v55, 127
    %v57 = vpop.permute.xlu0 %56
    %v58 = vadd.f32 %v55, %v57
    %v59 = vmul.f32 %v58, 0.25
    %v60 = vadd.f32 %v59, 1e-05
    %v61 = vrsqrt.pop %v60
    %v62 = vmul.f32 %v60, %v61
    %vm63 = vcmp.eq.f32.partialorder %v60, inf
    %v64 = vsel %vm63, %v60, %v62
    %vm65 = vcmp.eq.f32.partialorder %v60, 0.0
    %v66 = vand.u32 %v60, 2147483648
    %v67 = vsel %vm65, %v66, %v64
    %v68 = vrot.slane %v67, 4
    %v69 = vadd.f32 %v67, %v68
    %v70 = vrot.slane %v69, 2
    %v71 = vadd.f32 %v69, %v70
    %v72 = vrot.slane %v71, 1
    %v73 = vadd.f32 %v71, %v72
    %74 = vst [vmem:[#allocation8] sm:$0x1] %v73
    // Predicated region
    $region26: #{tpu_custom_call.1} parent=1 // pred_check
      _
    $region27: #{tpu_custom_call.1} parent=1 // pred_check_branch
      %76 = sbr.rel (0) target = $region29
    $region28: #{tpu_custom_call.1} parent=1 // pred_region
      %s78 = ssub.s32 16, 16
      %79 = vsyncadd [#allocation4], %s78
      %s81 = sshll.u32 [#allocation8], 4
      %s82 = int_to_ptr.vmem [resolvable:$true] %s81
      %84 = dma.vmem_to_hbm [thread:$0]  %s82, 16, %s3, [#allocation4]
    $region29: #{tpu_custom_call.1} parent=1 // pred_fallthru
      _
    // Predicated region
    $region30: #{tpu_custom_call.1} parent=1 // pred_check
      _
    $region31: #{tpu_custom_call.1} parent=1 // pred_check_branch
      %86 = sbr.rel (0) target = $region33
    $region32: #{tpu_custom_call.1} parent=1 // pred_region
      %87 = dma.done [#allocation4], 16
    $region33: #{tpu_custom_call.1} parent=1 // pred_fallthru
      _
    %88 = vsyncpa [#allocation3], 1
    %89 = vsyncpa [#allocation6], 1
    %90 = vsyncpa [#allocation4], 1

</llo_original>
